<compile_context>
chip_gen: v6e
topology: v6e:2x2x1
jax: 0.10.0
libtpu: 0.0.40
codegen_flags: <defaults>
</compile_context>

<pallas_src>
import functools

import jax
import jax.numpy as jnp
from jax.experimental import pallas as pl
from jax.experimental.pallas import tpu as pltpu

LANE = 128


def _round_up(x, m):
    return (x + m - 1) // m * m


def _pad2d(arr, rows, cols):
    return jnp.pad(arr, ((0, rows - arr.shape[0]), (0, cols - arr.shape[1])))


def _gcn_fused_kernel(a_ref, x_ref, w1_ref, b1_ref, w2_ref, b2_ref, o_ref, h_ref,
                      *, num_classes):
    # ----- layer 1: h = relu(A_hat @ (X @ W1) + b1)  (bf16 MXU, f32 accumulate) -----
    xw = jnp.dot(x_ref[...], w1_ref[...], preferred_element_type=jnp.float32)
    h = jnp.dot(a_ref[...], xw.astype(jnp.bfloat16), preferred_element_type=jnp.float32)
    h = jnp.maximum(h + b1_ref[...], 0.0)
    # keep hidden activations resident in VMEM scratch (bf16) between the two layers
    h_ref[...] = h.astype(jnp.bfloat16)

    # TODO(synk): F.dropout(training=self.training) — identity in eval mode; training-mode
    # dropout would use pltpu.prng_seed / pltpu.prng_random_bits here.

    # ----- layer 2: logits = A_hat @ (h @ W2) + b2 -----
    hw = jnp.dot(h_ref[...], w2_ref[...], preferred_element_type=jnp.float32)
    logits = jnp.dot(a_ref[...], hw.astype(jnp.bfloat16),
                     preferred_element_type=jnp.float32)
    logits = logits + b2_ref[...]

    # mask padded class columns so the log_softmax reductions ignore them
    col = jax.lax.broadcasted_iota(jnp.int32, logits.shape, 1)
    logits = jnp.where(col < num_classes, logits, -jnp.inf)

    # ----- log_softmax (f32 epilogue) -----
    m = jnp.max(logits, axis=-1, keepdims=True)
    s = jnp.sum(jnp.exp(logits - m), axis=-1, keepdims=True)
    o_ref[...] = (logits - (m + jnp.log(s))).astype(o_ref.dtype)


def gcn_fused(a_hat, x, w1, b1, w2, b2):
    """Fused 2-layer GCN forward: log_softmax(A @ relu(A @ (X@W1) + b1) @ W2 + b2)."""
    n, f = x.shape
    hid = w1.shape[1]
    c = w2.shape[1]

    n_p = _round_up(n, LANE)   # lane-dense adjacency / contraction dims
    f_p = _round_up(f, LANE)
    h_p = _round_up(hid, LANE)
    c_p = _round_up(c, LANE)

    # zero-pad (padded A rows/cols and X rows are zero, so real outputs are unchanged)
    a_p = _pad2d(a_hat, n_p, n_p).astype(jnp.bfloat16)
    x_p = _pad2d(x, n_p, f_p).astype(jnp.bfloat16)
    w1_p = _pad2d(w1, f_p, h_p).astype(jnp.bfloat16)
    w2_p = _pad2d(w2, h_p, c_p).astype(jnp.bfloat16)
    b1_p = _pad2d(b1.reshape(1, hid).astype(jnp.float32), 1, h_p)
    b2_p = _pad2d(b2.reshape(1, c).astype(jnp.float32), 1, c_p)

    flops = 2 * (n_p * f_p * h_p + n_p * n_p * h_p + n_p * h_p * c_p + n_p * n_p * c_p)
    bytes_accessed = (a_p.size * 2 + x_p.size * 2 + w1_p.size * 2 + w2_p.size * 2
                      + b1_p.size * 4 + b2_p.size * 4 + n_p * c_p * 4)
    cost = pl.CostEstimate(flops=flops,
                           transcendentals=n_p * c_p + n_p,
                           bytes_accessed=bytes_accessed)

    # explicit VMEM budget (inputs + output + h scratch), valid on v5e/v6e/v7x
    vmem_needed = bytes_accessed + n_p * h_p * 2
    vmem_limit = int(min(64 * 2**20, max(2 * vmem_needed, 16 * 2**20)))

    kernel = functools.partial(_gcn_fused_kernel, num_classes=c)
    out_padded = pl.pallas_call(
        kernel,
        out_shape=jax.ShapeDtypeStruct((n_p, c_p), jnp.float32),
        in_specs=[
            pl.BlockSpec((n_p, n_p), lambda: (0, 0)),   # A_hat (resident once)
            pl.BlockSpec((n_p, f_p), lambda: (0, 0)),   # X
            pl.BlockSpec((f_p, h_p), lambda: (0, 0)),   # W1
            pl.BlockSpec((1, h_p), lambda: (0, 0)),     # b1
            pl.BlockSpec((h_p, c_p), lambda: (0, 0)),   # W2
            pl.BlockSpec((1, c_p), lambda: (0, 0)),     # b2
        ],
        out_specs=pl.BlockSpec((n_p, c_p), lambda: (0, 0)),
        scratch_shapes=[pltpu.VMEM((n_p, h_p), jnp.bfloat16)],  # hidden activations
        compiler_params=pltpu.CompilerParams(vmem_limit_bytes=vmem_limit),
        cost_estimate=cost,
    )(a_p, x_p, w1_p, b1_p, w2_p, b2_p)

    return out_padded[:n, :c]


def build_normalized_adjacency(edge_index, num_nodes):
    """Dense D^{-1/2}(A + I)D^{-1/2} matching PyG GCNConv normalization.

    Duplicate edges are scatter-added (like message passing sums duplicate messages),
    and self-loops are only added for nodes that do not already have one
    (add_remaining_self_loops semantics)."""
    src = edge_index[0]
    dst = edge_index[1]
    a = jnp.zeros((num_nodes, num_nodes), dtype=jnp.float32)
    a = a.at[dst, src].add(1.0)            # out[dst] aggregates x[src]
    diag = jnp.diagonal(a)
    a = a + jnp.diag(jnp.where(diag == 0.0, 1.0, 0.0))
    deg = jnp.sum(a, axis=1)
    d_inv_sqrt = jnp.where(deg > 0, jax.lax.rsqrt(deg), 0.0)
    return d_inv_sqrt[:, None] * a * d_inv_sqrt[None, :]


def gcn_forward(x, edge_index, params):
    """Forward pass of the GCN module (eval semantics: dropout is identity)."""
    n = x.shape[0]
    a_hat = build_normalized_adjacency(edge_index, n)
    return gcn_fused(a_hat, x, params["w1"], params["b1"], params["w2"], params["b2"])


def init_params(key, num_features, hidden, num_classes):
    k1, k2 = jax.random.split(key)
    lim1 = (6.0 / (num_features + hidden)) ** 0.5
    lim2 = (6.0 / (hidden + num_classes)) ** 0.5
    return {
        "w1": jax.random.uniform(k1, (num_features, hidden), jnp.float32, -lim1, lim1),
        "b1": jnp.zeros((hidden,), jnp.float32),
        "w2": jax.random.uniform(k2, (hidden, num_classes), jnp.float32, -lim2, lim2),
        "b2": jnp.zeros((num_classes,), jnp.float32),
    }


if __name__ == "__main__":
    key = jax.random.PRNGKey(0)
    k_x, k_e, k_p = jax.random.split(key, 3)

    num_nodes = 16
    num_features = 8
    hidden = 32
    num_classes = 4
    num_edges = 40

    x = jax.random.normal(k_x, (num_nodes, num_features), dtype=jnp.float32)
    edge_index = jax.random.randint(k_e, (2, num_edges), 0, num_nodes, dtype=jnp.int32)
    params = init_params(k_p, num_features, hidden, num_classes)

    out = gcn_forward(x, edge_index, params)
    out = jax.block_until_ready(out)

    # plain-JAX reference mirroring the kernel's bf16-input / f32-accumulate math
    a_hat = build_normalized_adjacency(edge_index, num_nodes)
    a_bf = a_hat.astype(jnp.bfloat16)
    x_bf = x.astype(jnp.bfloat16)
    xw = jnp.dot(x_bf, params["w1"].astype(jnp.bfloat16),
                 preferred_element_type=jnp.float32)
    h = jnp.maximum(
        jnp.dot(a_bf, xw.astype(jnp.bfloat16), preferred_element_type=jnp.float32)
        + params["b1"], 0.0)
    hw = jnp.dot(h.astype(jnp.bfloat16), params["w2"].astype(jnp.bfloat16),
                 preferred_element_type=jnp.float32)
    logits = jnp.dot(a_bf, hw.astype(jnp.bfloat16),
                     preferred_element_type=jnp.float32) + params["b2"]
    ref = logits - jax.scipy.special.logsumexp(logits, axis=1, keepdims=True)

    assert out.shape == (num_nodes, num_classes)
    assert jnp.allclose(out, ref, atol=5e-3, rtol=5e-3)

    print("KERNEL_OK")
</pallas_src>

<mosaic_0001>
module attributes {stable_mosaic.version = 11 : i64} {
  func.func @_gcn_fused_kernel(%arg0: memref<128x128xbf16, #tpu.memory_space<vmem>>, %arg1: memref<128x128xbf16, #tpu.memory_space<vmem>>, %arg2: memref<128x128xbf16, #tpu.memory_space<vmem>>, %arg3: memref<1x128xf32, #tpu.memory_space<vmem>>, %arg4: memref<128x128xbf16, #tpu.memory_space<vmem>>, %arg5: memref<1x128xf32, #tpu.memory_space<vmem>>, %arg6: memref<128x128xf32, #tpu.memory_space<vmem>>, %arg7: memref<128x128xbf16, #tpu.memory_space<vmem>>) attributes {dimension_semantics = [], scalar_prefetch = 0 : i64, scratch_operands = 1 : i64, tpu.core_type = #tpu.core_type<tc>} {
    %c0 = arith.constant 0 : index
    %c0_0 = arith.constant 0 : index
    %0 = vector.load %arg1[%c0, %c0_0] : memref<128x128xbf16, #tpu.memory_space<vmem>>, vector<128x128xbf16>
    %c0_1 = arith.constant 0 : index
    %c0_2 = arith.constant 0 : index
    %1 = vector.load %arg2[%c0_1, %c0_2] : memref<128x128xbf16, #tpu.memory_space<vmem>>, vector<128x128xbf16>
    %cst = arith.constant dense<0.000000e+00> : vector<128x128xf32>
    %2 = tpu.matmul %0, %1, %cst {dimension_numbers = #tpu.dot_dimension_numbers<[1], [0], [0], [1], [0, 0, 1, 1], [], []>} : vector<128x128xbf16>, vector<128x128xbf16>, vector<128x128xf32> -> vector<128x128xf32>
    %c0_3 = arith.constant 0 : index
    %c0_4 = arith.constant 0 : index
    %3 = vector.load %arg0[%c0_3, %c0_4] : memref<128x128xbf16, #tpu.memory_space<vmem>>, vector<128x128xbf16>
    %4 = arith.truncf %2 : vector<128x128xf32> to vector<128x128xbf16>
    %cst_5 = arith.constant dense<0.000000e+00> : vector<128x128xf32>
    %5 = tpu.matmul %3, %4, %cst_5 {dimension_numbers = #tpu.dot_dimension_numbers<[1], [0], [0], [1], [0, 0, 1, 1], [], []>} : vector<128x128xbf16>, vector<128x128xbf16>, vector<128x128xf32> -> vector<128x128xf32>
    %c0_6 = arith.constant 0 : index
    %c0_7 = arith.constant 0 : index
    %6 = vector.load %arg3[%c0_6, %c0_7] : memref<1x128xf32, #tpu.memory_space<vmem>>, vector<1x128xf32>
    %7 = vector.broadcast %6 : vector<1x128xf32> to vector<128x128xf32>
    %8 = arith.addf %5, %7 : vector<128x128xf32>
    %cst_8 = arith.constant 0.000000e+00 : f32
    %9 = vector.broadcast %cst_8 : f32 to vector<128x128xf32>
    %10 = arith.maximumf %8, %9 : vector<128x128xf32>
    %11 = arith.truncf %10 : vector<128x128xf32> to vector<128x128xbf16>
    %c0_9 = arith.constant 0 : index
    %c0_10 = arith.constant 0 : index
    %12 = vector.load %arg7[%c0_9, %c0_10] : memref<128x128xbf16, #tpu.memory_space<vmem>>, vector<128x128xbf16>
    tpu.vector_store %arg7[%c0_9, %c0_10], %11 {strides = array<i32>} : memref<128x128xbf16, #tpu.memory_space<vmem>>, vector<128x128xbf16>,
    %c0_11 = arith.constant 0 : index
    %c0_12 = arith.constant 0 : index
    %13 = vector.load %arg7[%c0_11, %c0_12] : memref<128x128xbf16, #tpu.memory_space<vmem>>, vector<128x128xbf16>
    %c0_13 = arith.constant 0 : index
    %c0_14 = arith.constant 0 : index
    %14 = vector.load %arg4[%c0_13, %c0_14] : memref<128x128xbf16, #tpu.memory_space<vmem>>, vector<128x128xbf16>
    %cst_15 = arith.constant dense<0.000000e+00> : vector<128x128xf32>
    %15 = tpu.matmul %13, %14, %cst_15 {dimension_numbers = #tpu.dot_dimension_numbers<[1], [0], [0], [1], [0, 0, 1, 1], [], []>} : vector<128x128xbf16>, vector<128x128xbf16>, vector<128x128xf32> -> vector<128x128xf32>
    %c0_16 = arith.constant 0 : index
    %c0_17 = arith.constant 0 : index
    %16 = vector.load %arg0[%c0_16, %c0_17] : memref<128x128xbf16, #tpu.memory_space<vmem>>, vector<128x128xbf16>
    %17 = arith.truncf %15 : vector<128x128xf32> to vector<128x128xbf16>
    %cst_18 = arith.constant dense<0.000000e+00> : vector<128x128xf32>
    %18 = tpu.matmul %16, %17, %cst_18 {dimension_numbers = #tpu.dot_dimension_numbers<[1], [0], [0], [1], [0, 0, 1, 1], [], []>} : vector<128x128xbf16>, vector<128x128xbf16>, vector<128x128xf32> -> vector<128x128xf32>
    %c0_19 = arith.constant 0 : index
    %c0_20 = arith.constant 0 : index
    %19 = vector.load %arg5[%c0_19, %c0_20] : memref<1x128xf32, #tpu.memory_space<vmem>>, vector<1x128xf32>
    %20 = vector.broadcast %19 : vector<1x128xf32> to vector<128x128xf32>
    %21 = arith.addf %18, %20 : vector<128x128xf32>
    %22 = tpu.iota {dimensions = array<i32: 1>} : vector<128x128xi32>
    %c4_i32 = arith.constant 4 : i32
    %23 = vector.broadcast %c4_i32 : i32 to vector<128x128xi32>
    %24 = arith.cmpi slt, %22, %23 : vector<128x128xi32>
    %cst_21 = arith.constant 0xFF800000 : f32
    %25 = vector.broadcast %cst_21 : f32 to vector<128x128xf32>
    %26 = arith.select %24, %21, %25 : vector<128x128xi1>, vector<128x128xf32>
    %cst_22 = arith.constant dense<0xFF800000> : vector<128xf32>
    %27 = vector.multi_reduction <maximumf>, %26, %cst_22 [1] : vector<128x128xf32> to vector<128xf32>
    %28 = vector.shape_cast %27 : vector<128xf32> to vector<128x1xf32>
    %29 = vector.broadcast %28 : vector<128x1xf32> to vector<128x128xf32>
    %30 = arith.subf %26, %29 : vector<128x128xf32>
    %31 = math.exp %30 : vector<128x128xf32>
    %cst_23 = arith.constant dense<0.000000e+00> : vector<128xf32>
    %32 = vector.multi_reduction <add>, %31, %cst_23 [1] : vector<128x128xf32> to vector<128xf32>
    %33 = vector.shape_cast %32 : vector<128xf32> to vector<128x1xf32>
    %34 = math.log %33 : vector<128x1xf32>
    %35 = arith.addf %28, %34 : vector<128x1xf32>
    %36 = vector.broadcast %35 : vector<128x1xf32> to vector<128x128xf32>
    %37 = arith.subf %26, %36 : vector<128x128xf32>
    %c0_24 = arith.constant 0 : index
    %c0_25 = arith.constant 0 : index
    %38 = vector.load %arg6[%c0_24, %c0_25] : memref<128x128xf32, #tpu.memory_space<vmem>>, vector<128x128xf32>
    tpu.vector_store %arg6[%c0_24, %c0_25], %37 {strides = array<i32>} : memref<128x128xf32, #tpu.memory_space<vmem>>, vector<128x128xf32>,
    return
  }
}

</mosaic_0001>

<llo_original>
// kernel: tpu_custom_call.1
$region0: #{tpu_custom_call.1}
  #allocation0 [shape = 'u32[]', space=smem, size = 0x4, offset = 0x4, fixed_abs, tag = 'smem constant byte address 0x4 - core index']
  #allocation1 [shape = 'u32[144,128]{1,0:T(1,128)}', space=vmem, size = 0x12000, scoped, tag = 'internal scratch']
  #allocation2 [shape = 'bf16[128,128]{1,0:T(8,128)(2,1)}', space=vmem, size = 0x8000, scoped, tag = 'scratch operand']
  %s0 = inlined_call_operand.hbm [shape: bf16[128,128], index: 0, kind: input, shape index: {}]
  %s1 = inlined_call_operand.hbm [shape: bf16[128,128], index: 1, kind: input, shape index: {}]
  %s2 = inlined_call_operand.hbm [shape: bf16[128,128], index: 2, kind: input, shape index: {}]
  %s3 = inlined_call_operand.vmem [shape: f32[1,128], index: 3, kind: input, shape index: {}]
  %s4 = inlined_call_operand.hbm [shape: bf16[128,128], index: 4, kind: input, shape index: {}]
  %s5 = inlined_call_operand.vmem [shape: f32[1,128], index: 5, kind: input, shape index: {}]
  %s6 = inlined_call_operand.hbm [shape: f32[128,128], index: 6, kind: output, shape index: {}]
  %s7 = sld [smem:[#allocation0]]
  $region50: #{tpu_custom_call.1} parent=0
    _
  %s9 = ssub.s32 1, %s7
  %s10 = scalar_select 0, %s9, %s7
  $region1: #{tpu_custom_call.1} parent=0
    #allocation3 [shape = 'u8[32768]{0}', space=vmem, size = 0x8000, scoped, tag = 'input window, operand 0, single buffered']
    #allocation4 [shape = 's32[1]{0}', space=sflag, size = 0x4, scoped, tag = 'scoped memory for tpu_custom_call.1']
    #allocation5 [shape = 's32[1]{0}', space=sflag, size = 0x4, scoped, tag = 'scoped memory for tpu_custom_call.1']
    #allocation6 [shape = 'u8[32768]{0}', space=vmem, size = 0x8000, scoped, tag = 'input window, operand 1, single buffered']
    #allocation7 [shape = 's32[1]{0}', space=sflag, size = 0x4, scoped, tag = 'scoped memory for tpu_custom_call.1']
    #allocation8 [shape = 'u8[32768]{0}', space=vmem, size = 0x8000, scoped, tag = 'input window, operand 2, single buffered']
    #allocation9 [shape = 'u8[32768]{0}', space=vmem, size = 0x8000, scoped, tag = 'input window, operand 4, single buffered']
    #allocation10 [shape = 's32[1]{0}', space=sflag, size = 0x4, scoped, tag = 'scoped memory for tpu_custom_call.1']
    #allocation11 [shape = 'u8[65536]{0}', space=vmem, size = 0x10000, scoped, tag = 'output window, operand 0, single buffered']
    %11 = vsyncpa [#allocation4], 0
    %12 = vsyncpa [#allocation7], 0
    %13 = vsyncpa [#allocation10], 0
    %14 = vsyncpa [#allocation5], 0
    // Predicated region
    $region2: #{tpu_custom_call.1} parent=1 // pred_check
      _
    $region3: #{tpu_custom_call.1} parent=1 // pred_check_branch
      %16 = sbr.rel (0) target = $region5
    $region4: #{tpu_custom_call.1} parent=1 // pred_region
      %s18 = ssub.s32 1024, 1024
      %19 = vsyncadd [#allocation4], %s18
      %s20 = sshll.u32 [#allocation3], 4
      %s21 = int_to_ptr.vmem [resolvable:$true] %s20
      %26 = dma.hbm_to_vmem [thread:$0]  %s0, 1024, %s21, [#allocation4], 64, 64, 4
    $region5: #{tpu_custom_call.1} parent=1 // pred_fallthru
      _
    // Predicated region
    $region6: #{tpu_custom_call.1} parent=1 // pred_check
      _
    $region7: #{tpu_custom_call.1} parent=1 // pred_check_branch
      %28 = sbr.rel (0) target = $region9
    $region8: #{tpu_custom_call.1} parent=1 // pred_region
      %s30 = ssub.s32 1024, 1024
      %31 = vsyncadd [#allocation7], %s30
      %s32 = sshll.u32 [#allocation6], 4
      %s33 = int_to_ptr.vmem [resolvable:$true] %s32
      %38 = dma.hbm_to_vmem [thread:$0]  %s1, 1024, %s33, [#allocation7], 64, 64, 4
    $region9: #{tpu_custom_call.1} parent=1 // pred_fallthru
      _
    // Predicated region
    $region10: #{tpu_custom_call.1} parent=1 // pred_check
      _
    $region11: #{tpu_custom_call.1} parent=1 // pred_check_branch
      %40 = sbr.rel (0) target = $region13
    $region12: #{tpu_custom_call.1} parent=1 // pred_region
      %s42 = ssub.s32 1024, 1024
      %43 = vsyncadd [#allocation7], %s42
      %s44 = sshll.u32 [#allocation8], 4
      %s45 = int_to_ptr.vmem [resolvable:$true] %s44
      %50 = dma.hbm_to_vmem [thread:$0]  %s2, 1024, %s45, [#allocation7], 64, 64, 4
    $region13: #{tpu_custom_call.1} parent=1 // pred_fallthru
      _
    // Predicated region
    $region14: #{tpu_custom_call.1} parent=1 // pred_check
      _
    $region15: #{tpu_custom_call.1} parent=1 // pred_check_branch
      %52 = sbr.rel (0) target = $region17
    $region16: #{tpu_custom_call.1} parent=1 // pred_region
      _
    $region17: #{tpu_custom_call.1} parent=1 // pred_fallthru
      _
    // Predicated region
    $region18: #{tpu_custom_call.1} parent=1 // pred_check
      _
    $region19: #{tpu_custom_call.1} parent=1 // pred_check_branch
      %54 = sbr.rel (0) target = $region21
    $region20: #{tpu_custom_call.1} parent=1 // pred_region
      %s56 = ssub.s32 1024, 1024
      %57 = vsyncadd [#allocation10], %s56
      %s58 = sshll.u32 [#allocation9], 4
      %s59 = int_to_ptr.vmem [resolvable:$true] %s58
      %64 = dma.hbm_to_vmem [thread:$0]  %s4, 1024, %s59, [#allocation10], 64, 64, 4
    $region21: #{tpu_custom_call.1} parent=1 // pred_fallthru
      _
    // Predicated region
    $region22: #{tpu_custom_call.1} parent=1 // pred_check
      _
    $region23: #{tpu_custom_call.1} parent=1 // pred_check_branch
      %66 = sbr.rel (0) target = $region25
    $region24: #{tpu_custom_call.1} parent=1 // pred_region
      _
    $region25: #{tpu_custom_call.1} parent=1 // pred_fallthru
      _
    // Predicated region
    $region26: #{tpu_custom_call.1} parent=1 // pred_check
      _
    $region27: #{tpu_custom_call.1} parent=1 // pred_check_branch
      %68 = sbr.rel (0) target = $region29
    $region28: #{tpu_custom_call.1} parent=1 // pred_region
      %69 = dma.done [#allocation4], 1024
    $region29: #{tpu_custom_call.1} parent=1 // pred_fallthru
      _
    // Predicated region
    $region30: #{tpu_custom_call.1} parent=1 // pred_check
      _
    $region31: #{tpu_custom_call.1} parent=1 // pred_check_branch
      %71 = sbr.rel (0) target = $region33
    $region32: #{tpu_custom_call.1} parent=1 // pred_region
      %72 = dma.done [#allocation7], 1024
    $region33: #{tpu_custom_call.1} parent=1 // pred_fallthru
      _
    // Predicated region
    $region34: #{tpu_custom_call.1} parent=1 // pred_check
      _
    $region35: #{tpu_custom_call.1} parent=1 // pred_check_branch
      %74 = sbr.rel (0) target = $region37
    $region36: #{tpu_custom_call.1} parent=1 // pred_region
      %75 = dma.done [#allocation7], 1024
    $region37: #{tpu_custom_call.1} parent=1 // pred_fallthru
      _
    // Predicated region
    $region38: #{tpu_custom_call.1} parent=1 // pred_check
      _
    $region39: #{tpu_custom_call.1} parent=1 // pred_check_branch
      %77 = sbr.rel (0) target = $region41
    $region40: #{tpu_custom_call.1} parent=1 // pred_region
      %78 = dma.done [#allocation10], 1024
    $region41: #{tpu_custom_call.1} parent=1 // pred_fallthru
      _
    %v80 = vld [vmem:[#allocation6] sm:$0xf]
    %v81 = vld [vmem:[#allocation6 + $0x4] sm:$0xf]
    %v82 = vld [vmem:[#allocation6 + $0x8] sm:$0xf]
    %v83 = vld [vmem:[#allocation6 + $0xc] sm:$0xf]
    %v84 = vld [vmem:[#allocation6 + $0x10] sm:$0xf]
    %v85 = vld [vmem:[#allocation6 + $0x14] sm:$0xf]
    %v86 = vld [vmem:[#allocation6 + $0x18] sm:$0xf]
    %v87 = vld [vmem:[#allocation6 + $0x1c] sm:$0xf]
    %v88 = vld [vmem:[#allocation6 + $0x20] sm:$0xf]
    %v89 = vld [vmem:[#allocation6 + $0x24] sm:$0xf]
    %v90 = vld [vmem:[#allocation6 + $0x28] sm:$0xf]
    %v91 = vld [vmem:[#allocation6 + $0x2c] sm:$0xf]
    %v92 = vld [vmem:[#allocation6 + $0x30] sm:$0xf]
    %v93 = vld [vmem:[#allocation6 + $0x34] sm:$0xf]
    %v94 = vld [vmem:[#allocation6 + $0x38] sm:$0xf]
    %v95 = vld [vmem:[#allocation6 + $0x3c] sm:$0xf]
    %v96 = vld [vmem:[#allocation8] sm:$0xf]
    %v97 = vld [vmem:[#allocation8 + $0x4] sm:$0xf]
    %v98 = vld [vmem:[#allocation8 + $0x8] sm:$0xf]
    %v99 = vld [vmem:[#allocation8 + $0xc] sm:$0xf]
    %v100 = vld [vmem:[#allocation8 + $0x10] sm:$0xf]
    %v101 = vld [vmem:[#allocation8 + $0x14] sm:$0xf]
    %v102 = vld [vmem:[#allocation8 + $0x18] sm:$0xf]
    %v103 = vld [vmem:[#allocation8 + $0x1c] sm:$0xf]
    %v104 = vld [vmem:[#allocation8 + $0x20] sm:$0xf]
    %v105 = vld [vmem:[#allocation8 + $0x24] sm:$0xf]
    %v106 = vld [vmem:[#allocation8 + $0x28] sm:$0xf]
    %v107 = vld [vmem:[#allocation8 + $0x2c] sm:$0xf]
    %v108 = vld [vmem:[#allocation8 + $0x30] sm:$0xf]
    %v109 = vld [vmem:[#allocation8 + $0x34] sm:$0xf]
    %v110 = vld [vmem:[#allocation8 + $0x38] sm:$0xf]
    %v111 = vld [vmem:[#allocation8 + $0x3c] sm:$0xf]
    %v128 = vunpack.c.l.b16 %v80
    %v129 = vunpack.c.l.b16 %v81
    %v130 = vunpack.c.l.b16 %v82
    %v131 = vunpack.c.l.b16 %v83
    %v132 = vunpack.c.l.b16 %v84
    %v133 = vunpack.c.l.b16 %v85
    %v134 = vunpack.c.l.b16 %v86
    %v135 = vunpack.c.l.b16 %v87
    %v136 = vunpack.c.l.b16 %v88
    %v137 = vunpack.c.l.b16 %v89
    %v138 = vunpack.c.l.b16 %v90
    %v139 = vunpack.c.l.b16 %v91
    %v140 = vunpack.c.l.b16 %v92
    %v141 = vunpack.c.l.b16 %v93
    %v142 = vunpack.c.l.b16 %v94
    %v143 = vunpack.c.l.b16 %v95
    %v144 = vpack.c.b16 %v129, %v128
    %v145 = vpack.c.b16 %v131, %v130
    %v146 = vpack.c.b16 %v133, %v132
    %v147 = vpack.c.b16 %v135, %v134
    %v148 = vpack.c.b16 %v137, %v136
    %v149 = vpack.c.b16 %v139, %v138
    %v150 = vpack.c.b16 %v141, %v140
    %v151 = vpack.c.b16 %v143, %v142
    %v176 = vunpack.c.l.b16 %v96
    %v177 = vunpack.c.l.b16 %v97
    %v178 = vunpack.c.l.b16 %v98
    %v179 = vunpack.c.l.b16 %v99
    %v180 = vunpack.c.l.b16 %v100
    %v181 = vunpack.c.l.b16 %v101
    %v182 = vunpack.c.l.b16 %v102
    %v183 = vunpack.c.l.b16 %v103
    %v184 = vunpack.c.l.b16 %v104
    %v185 = vunpack.c.l.b16 %v105
    %v186 = vunpack.c.l.b16 %v106
    %v187 = vunpack.c.l.b16 %v107
    %v188 = vunpack.c.l.b16 %v108
    %v189 = vunpack.c.l.b16 %v109
    %v190 = vunpack.c.l.b16 %v110
    %v191 = vunpack.c.l.b16 %v111
    %v192 = vpack.c.b16 %v177, %v176
    %v193 = vpack.c.b16 %v179, %v178
    %v194 = vpack.c.b16 %v181, %v180
    %v195 = vpack.c.b16 %v183, %v182
    %v196 = vpack.c.b16 %v185, %v184
    %v197 = vpack.c.b16 %v187, %v186
    %v198 = vpack.c.b16 %v189, %v188
    %v199 = vpack.c.b16 %v191, %v190
    %208 = vmatprep.subr.bf16.mxu0 0
    %209 = vmatpush1.bf16.msra.mxu0 %v199
    %210 = vmatprep.subr.bf16.mxu0 0
    %211 = vmatpush1.bf16.msra.mxu0 %v198
    %212 = vmatprep.subr.bf16.mxu0 0
    %213 = vmatpush1.bf16.msra.mxu0 %v197
    %214 = vmatprep.subr.bf16.mxu0 0
    %215 = vmatpush1.bf16.msra.mxu0 %v196
    %216 = vmatprep.subr.bf16.mxu0 0
    %217 = vmatpush1.bf16.msra.mxu0 %v195
    %218 = vmatprep.subr.bf16.mxu0 0
    %219 = vmatpush1.bf16.msra.mxu0 %v194
    %220 = vmatprep.subr.bf16.mxu0 0
    %221 = vmatpush1.bf16.msra.mxu0 %v193
    %222 = vmatprep.subr.bf16.mxu0 0
    %223 = vmatpush1.bf16.msra.mxu0 %v192
    %224 = vmatprep.subr.bf16.mxu0 0
    %225 = vmatpush2.bf16.msra.mxu0 0
    %226 = vmatprep.subr.bf16.mxu0 0
    %227 = vmatpush2.bf16.msra.mxu0 0
    %228 = vmatprep.subr.bf16.mxu0 0
    %229 = vmatpush2.bf16.msra.mxu0 0
    %230 = vmatprep.subr.bf16.mxu0 0
    %231 = vmatpush2.bf16.msra.mxu0 0
    %232 = vmatprep.subr.bf16.mxu0 0
    %233 = vmatpush2.bf16.msra.mxu0 0
    %234 = vmatprep.subr.bf16.mxu0 0
    %235 = vmatpush2.bf16.msra.mxu0 0
    %236 = vmatprep.subr.bf16.mxu0 0
    %237 = vmatpush2.bf16.msra.mxu0 0
    %238 = vmatprep.subr.bf16.mxu0 0
    %239 = vmatpush2.bf16.msra.mxu0 0
    %240 = vmatprep.mubr.bf16.mxu0 0
    %241 = vmatmul.mubr.bf16.gmra.mxu0 %v144
    %v242 = vpop.f32.mrf.mxu0
    %v243 = vadd.f32 0.0, %v242
    %v244 = vpop.f32.mrf.mxu0
    %v245 = vpop.f32.mrf.mxu0
    %v246 = vadd.f32 0.0, %v245
    %v247 = vpop.f32.mrf.mxu0
    %248 = vmatprep.mubr.bf16.mxu0 0
    %249 = vmatmul.mubr.bf16.gmra.mxu0 %v145
    %v250 = vpop.f32.mrf.mxu0
    %v251 = vadd.f32 0.0, %v250
    %v252 = vpop.f32.mrf.mxu0
    %v253 = vpop.f32.mrf.mxu0
    %v254 = vadd.f32 0.0, %v253
    %v255 = vpop.f32.mrf.mxu0
    %256 = vmatprep.mubr.bf16.mxu0 0
    %257 = vmatmul.mubr.bf16.gmra.mxu0 %v146
    %v258 = vpop.f32.mrf.mxu0
    %v259 = vadd.f32 0.0, %v258
    %v260 = vpop.f32.mrf.mxu0
    %v261 = vpop.f32.mrf.mxu0
    %v262 = vadd.f32 0.0, %v261
    %v263 = vpop.f32.mrf.mxu0
    %264 = vmatprep.mubr.bf16.mxu0 0
    %265 = vmatmul.mubr.bf16.gmra.mxu0 %v147
    %v266 = vpop.f32.mrf.mxu0
    %v267 = vadd.f32 0.0, %v266
    %v268 = vpop.f32.mrf.mxu0
    %v269 = vpop.f32.mrf.mxu0
    %v270 = vadd.f32 0.0, %v269
    %v271 = vpop.f32.mrf.mxu0
    %272 = vmatprep.mubr.bf16.mxu0 0
    %273 = vmatmul.mubr.bf16.gmra.mxu0 %v148
    %v274 = vpop.f32.mrf.mxu0
    %v275 = vadd.f32 0.0, %v274
    %v276 = vpop.f32.mrf.mxu0
    %v277 = vpop.f32.mrf.mxu0
    %v278 = vadd.f32 0.0, %v277
    %v279 = vpop.f32.mrf.mxu0
    %280 = vmatprep.mubr.bf16.mxu0 0
    %281 = vmatmul.mubr.bf16.gmra.mxu0 %v149
    %v282 = vpop.f32.mrf.mxu0
    %v283 = vadd.f32 0.0, %v282
    %v284 = vpop.f32.mrf.mxu0
    %v285 = vpop.f32.mrf.mxu0
    %v286 = vadd.f32 0.0, %v285
    %v287 = vpop.f32.mrf.mxu0
    %288 = vmatprep.mubr.bf16.mxu0 0
    %289 = vmatmul.mubr.bf16.gmra.mxu0 %v150
    %v290 = vpop.f32.mrf.mxu0
    %v291 = vadd.f32 0.0, %v290
    %v292 = vpop.f32.mrf.mxu0
    %v293 = vpop.f32.mrf.mxu0
    %v294 = vadd.f32 0.0, %v293
    %v295 = vpop.f32.mrf.mxu0
    %296 = vmatprep.mubr.bf16.mxu0 0
    %297 = vmatmul.mubr.bf16.gmra.mxu0 %v151
    %v298 = vpop.f32.mrf.mxu0
    %v299 = vadd.f32 0.0, %v298
    %v300 = vpop.f32.mrf.mxu0
    %v301 = vpop.f32.mrf.mxu0
    %v302 = vadd.f32 0.0, %v301
    %v303 = vpop.f32.mrf.mxu0
    %304 = vdwg.mxu0
    %v305 = vld [vmem:[#allocation3] sm:$0xf]
    %v306 = vld [vmem:[#allocation3 + $0x4] sm:$0xf]
    %v307 = vld [vmem:[#allocation3 + $0x8] sm:$0xf]
    %v308 = vld [vmem:[#allocation3 + $0xc] sm:$0xf]
    %v309 = vld [vmem:[#allocation3 + $0x10] sm:$0xf]
    %v310 = vld [vmem:[#allocation3 + $0x14] sm:$0xf]
    %v311 = vld [vmem:[#allocation3 + $0x18] sm:$0xf]
    %v312 = vld [vmem:[#allocation3 + $0x1c] sm:$0xf]
    %v313 = vld [vmem:[#allocation3 + $0x20] sm:$0xf]
    %v314 = vld [vmem:[#allocation3 + $0x24] sm:$0xf]
    %v315 = vld [vmem:[#allocation3 + $0x28] sm:$0xf]
    %v316 = vld [vmem:[#allocation3 + $0x2c] sm:$0xf]
    %v317 = vld [vmem:[#allocation3 + $0x30] sm:$0xf]
    %v318 = vld [vmem:[#allocation3 + $0x34] sm:$0xf]
    %v319 = vld [vmem:[#allocation3 + $0x38] sm:$0xf]
    %v320 = vld [vmem:[#allocation3 + $0x3c] sm:$0xf]
    %v321 = vpack.c.bf16 %v246, %v243
    %v322 = vpack.c.bf16 %v254, %v251
    %v323 = vpack.c.bf16 %v262, %v259
    %v324 = vpack.c.bf16 %v270, %v267
    %v325 = vpack.c.bf16 %v278, %v275
    %v326 = vpack.c.bf16 %v286, %v283
    %v327 = vpack.c.bf16 %v294, %v291
    %v328 = vpack.c.bf16 %v302, %v299
    %v329 = vld [vmem:[%s3] sm:$0x1]
    %v331 = vlaneseq
    %v332 = vshrl.u32 %v331, 7
    %v333 = vsub.s32 0, %v332
    %v334 = vrot.slane %v329, %v333
    %v352 = vunpack.c.l.b16 %v305
    %v353 = vunpack.c.l.b16 %v306
    %v354 = vunpack.c.l.b16 %v307
    %v355 = vunpack.c.l.b16 %v308
    %v356 = vunpack.c.l.b16 %v309
    %v357 = vunpack.c.l.b16 %v310
    %v358 = vunpack.c.l.b16 %v311
    %v359 = vunpack.c.l.b16 %v312
    %v360 = vunpack.c.l.b16 %v313
    %v361 = vunpack.c.l.b16 %v314
    %v362 = vunpack.c.l.b16 %v315
    %v363 = vunpack.c.l.b16 %v316
    %v364 = vunpack.c.l.b16 %v317
    %v365 = vunpack.c.l.b16 %v318
    %v366 = vunpack.c.l.b16 %v319
    %v367 = vunpack.c.l.b16 %v320
    %v368 = vpack.c.b16 %v353, %v352
    %v369 = vpack.c.b16 %v355, %v354
    %v370 = vpack.c.b16 %v357, %v356
    %v371 = vpack.c.b16 %v359, %v358
    %v372 = vpack.c.b16 %v361, %v360
    %v373 = vpack.c.b16 %v363, %v362
    %v374 = vpack.c.b16 %v365, %v364
    %v375 = vpack.c.b16 %v367, %v366
    %384 = vmatprep.subr.bf16.mxu0 0
    %385 = vmatpush1.bf16.msra.mxu0 %v328
    %386 = vmatprep.subr.bf16.mxu0 0
    %387 = vmatpush1.bf16.msra.mxu0 %v327
    %388 = vmatprep.subr.bf16.mxu0 0
    %389 = vmatpush1.bf16.msra.mxu0 %v326
    %390 = vmatprep.subr.bf16.mxu0 0
    %391 = vmatpush1.bf16.msra.mxu0 %v325
    %392 = vmatprep.subr.bf16.mxu0 0
    %393 = vmatpush1.bf16.msra.mxu0 %v324
    %394 = vmatprep.subr.bf16.mxu0 0
    %395 = vmatpush1.bf16.msra.mxu0 %v323
    %396 = vmatprep.subr.bf16.mxu0 0
    %397 = vmatpush1.bf16.msra.mxu0 %v322
    %398 = vmatprep.subr.bf16.mxu0 0
    %399 = vmatpush1.bf16.msra.mxu0 %v321
    %400 = vmatprep.subr.bf16.mxu0 0
    %401 = vmatpush2.bf16.msra.mxu0 0
    %402 = vmatprep.subr.bf16.mxu0 0
    %403 = vmatpush2.bf16.msra.mxu0 0
    %404 = vmatprep.subr.bf16.mxu0 0
    %405 = vmatpush2.bf16.msra.mxu0 0
    %406 = vmatprep.subr.bf16.mxu0 0
    %407 = vmatpush2.bf16.msra.mxu0 0
    %408 = vmatprep.subr.bf16.mxu0 0
    %409 = vmatpush2.bf16.msra.mxu0 0
    %410 = vmatprep.subr.bf16.mxu0 0
    %411 = vmatpush2.bf16.msra.mxu0 0
    %412 = vmatprep.subr.bf16.mxu0 0
    %413 = vmatpush2.bf16.msra.mxu0 0
    %414 = vmatprep.subr.bf16.mxu0 0
    %415 = vmatpush2.bf16.msra.mxu0 0
    %416 = vmatprep.mubr.bf16.mxu0 0
    %417 = vmatmul.mubr.bf16.gmra.mxu0 %v368
    %v418 = vpop.f32.mrf.mxu0
    %v419 = vadd.f32 %v334, %v418
    %v420 = vpop.f32.mrf.mxu0
    %v421 = vpop.f32.mrf.mxu0
    %v422 = vadd.f32 %v334, %v421
    %v423 = vpop.f32.mrf.mxu0
    %424 = vmatprep.mubr.bf16.mxu0 0
    %425 = vmatmul.mubr.bf16.gmra.mxu0 %v369
    %v426 = vpop.f32.mrf.mxu0
    %v427 = vadd.f32 %v334, %v426
    %v428 = vpop.f32.mrf.mxu0
    %v429 = vpop.f32.mrf.mxu0
    %v430 = vadd.f32 %v334, %v429
    %v431 = vpop.f32.mrf.mxu0
    %432 = vmatprep.mubr.bf16.mxu0 0
    %433 = vmatmul.mubr.bf16.gmra.mxu0 %v370
    %v434 = vpop.f32.mrf.mxu0
    %v435 = vadd.f32 %v334, %v434
    %v436 = vpop.f32.mrf.mxu0
    %v437 = vpop.f32.mrf.mxu0
    %v438 = vadd.f32 %v334, %v437
    %v439 = vpop.f32.mrf.mxu0
    %440 = vmatprep.mubr.bf16.mxu0 0
    %441 = vmatmul.mubr.bf16.gmra.mxu0 %v371
    %v442 = vpop.f32.mrf.mxu0
    %v443 = vadd.f32 %v334, %v442
    %v444 = vpop.f32.mrf.mxu0
    %v445 = vpop.f32.mrf.mxu0
    %v446 = vadd.f32 %v334, %v445
    %v447 = vpop.f32.mrf.mxu0
    %448 = vmatprep.mubr.bf16.mxu0 0
    %449 = vmatmul.mubr.bf16.gmra.mxu0 %v372
    %v450 = vpop.f32.mrf.mxu0
    %v451 = vadd.f32 %v334, %v450
    %v452 = vpop.f32.mrf.mxu0
    %v453 = vpop.f32.mrf.mxu0
    %v454 = vadd.f32 %v334, %v453
    %v455 = vpop.f32.mrf.mxu0
    %456 = vmatprep.mubr.bf16.mxu0 0
    %457 = vmatmul.mubr.bf16.gmra.mxu0 %v373
    %v458 = vpop.f32.mrf.mxu0
    %v459 = vadd.f32 %v334, %v458
    %v460 = vpop.f32.mrf.mxu0
    %v461 = vpop.f32.mrf.mxu0
    %v462 = vadd.f32 %v334, %v461
    %v463 = vpop.f32.mrf.mxu0
    %464 = vmatprep.mubr.bf16.mxu0 0
    %465 = vmatmul.mubr.bf16.gmra.mxu0 %v374
    %v466 = vpop.f32.mrf.mxu0
    %v467 = vadd.f32 %v334, %v466
    %v468 = vpop.f32.mrf.mxu0
    %v469 = vpop.f32.mrf.mxu0
    %v470 = vadd.f32 %v334, %v469
    %v471 = vpop.f32.mrf.mxu0
    %472 = vmatprep.mubr.bf16.mxu0 0
    %473 = vmatmul.mubr.bf16.gmra.mxu0 %v375
    %v474 = vpop.f32.mrf.mxu0
    %v475 = vadd.f32 %v334, %v474
    %v476 = vpop.f32.mrf.mxu0
    %v477 = vpop.f32.mrf.mxu0
    %v478 = vadd.f32 %v334, %v477
    %v479 = vpop.f32.mrf.mxu0
    %480 = vdwg.mxu0
    %v481 = vmax.f32 %v419, 0.0
    %v482 = vmax.f32 %v422, 0.0
    %v483 = vmax.f32 %v427, 0.0
    %v484 = vmax.f32 %v430, 0.0
    %v485 = vmax.f32 %v435, 0.0
    %v486 = vmax.f32 %v438, 0.0
    %v487 = vmax.f32 %v443, 0.0
    %v488 = vmax.f32 %v446, 0.0
    %v489 = vmax.f32 %v451, 0.0
    %v490 = vmax.f32 %v454, 0.0
    %v491 = vmax.f32 %v459, 0.0
    %v492 = vmax.f32 %v462, 0.0
    %v493 = vmax.f32 %v467, 0.0
    %v494 = vmax.f32 %v470, 0.0
    %v495 = vmax.f32 %v475, 0.0
    %v496 = vmax.f32 %v478, 0.0
    %v497 = vpack.c.bf16 %v482, %v481
    %v498 = vpack.c.bf16 %v484, %v483
    %v499 = vpack.c.bf16 %v486, %v485
    %v500 = vpack.c.bf16 %v488, %v487
    %v501 = vpack.c.bf16 %v490, %v489
    %v502 = vpack.c.bf16 %v492, %v491
    %v503 = vpack.c.bf16 %v494, %v493
    %v504 = vpack.c.bf16 %v496, %v495
    %v513 = vunpack.c.l.b16 %v497
    %v514 = vunpack.c.h.b16 %v497
    %v515 = vunpack.c.l.b16 %v498
    %v516 = vunpack.c.h.b16 %v498
    %v517 = vunpack.c.l.b16 %v499
    %v518 = vunpack.c.h.b16 %v499
    %v519 = vunpack.c.l.b16 %v500
    %v520 = vunpack.c.h.b16 %v500
    %v521 = vunpack.c.l.b16 %v501
    %v522 = vunpack.c.h.b16 %v501
    %v523 = vunpack.c.l.b16 %v502
    %v524 = vunpack.c.h.b16 %v502
    %v525 = vunpack.c.l.b16 %v503
    %v526 = vunpack.c.h.b16 %v503
    %v527 = vunpack.c.l.b16 %v504
    %v528 = vunpack.c.h.b16 %v504
    %v529 = vpack.c.b16 %v513, %v513
    %v530 = vpack.c.b16 %v514, %v514
    %v531 = vpack.c.b16 %v515, %v515
    %v532 = vpack.c.b16 %v516, %v516
    %v533 = vpack.c.b16 %v517, %v517
    %v534 = vpack.c.b16 %v518, %v518
    %v535 = vpack.c.b16 %v519, %v519
    %v536 = vpack.c.b16 %v520, %v520
    %v537 = vpack.c.b16 %v521, %v521
    %v538 = vpack.c.b16 %v522, %v522
    %v539 = vpack.c.b16 %v523, %v523
    %v540 = vpack.c.b16 %v524, %v524
    %v541 = vpack.c.b16 %v525, %v525
    %v542 = vpack.c.b16 %v526, %v526
    %v543 = vpack.c.b16 %v527, %v527
    %v544 = vpack.c.b16 %v528, %v528
    %561 = vst [vmem:[#allocation2] sm:$0xf] %v529
    %562 = vst [vmem:[#allocation2 + $0x4] sm:$0xf] %v530
    %563 = vst [vmem:[#allocation2 + $0x8] sm:$0xf] %v531
    %564 = vst [vmem:[#allocation2 + $0xc] sm:$0xf] %v532
    %565 = vst [vmem:[#allocation2 + $0x10] sm:$0xf] %v533
    %566 = vst [vmem:[#allocation2 + $0x14] sm:$0xf] %v534
    %567 = vst [vmem:[#allocation2 + $0x18] sm:$0xf] %v535
    %568 = vst [vmem:[#allocation2 + $0x1c] sm:$0xf] %v536
    %569 = vst [vmem:[#allocation2 + $0x20] sm:$0xf] %v537
    %570 = vst [vmem:[#allocation2 + $0x24] sm:$0xf] %v538
    %571 = vst [vmem:[#allocation2 + $0x28] sm:$0xf] %v539
    %572 = vst [vmem:[#allocation2 + $0x2c] sm:$0xf] %v540
    %573 = vst [vmem:[#allocation2 + $0x30] sm:$0xf] %v541
    %574 = vst [vmem:[#allocation2 + $0x34] sm:$0xf] %v542
    %575 = vst [vmem:[#allocation2 + $0x38] sm:$0xf] %v543
    %576 = vst [vmem:[#allocation2 + $0x3c] sm:$0xf] %v544
    %v577 = vld [vmem:[#allocation2] sm:$0xf]
    %v578 = vld [vmem:[#allocation2 + $0x4] sm:$0xf]
    %v579 = vld [vmem:[#allocation2 + $0x8] sm:$0xf]
    %v580 = vld [vmem:[#allocation2 + $0xc] sm:$0xf]
    %v581 = vld [vmem:[#allocation2 + $0x10] sm:$0xf]
    %v582 = vld [vmem:[#allocation2 + $0x14] sm:$0xf]
    %v583 = vld [vmem:[#allocation2 + $0x18] sm:$0xf]
    %v584 = vld [vmem:[#allocation2 + $0x1c] sm:$0xf]
    %v585 = vld [vmem:[#allocation2 + $0x20] sm:$0xf]
    %v586 = vld [vmem:[#allocation2 + $0x24] sm:$0xf]
    %v587 = vld [vmem:[#allocation2 + $0x28] sm:$0xf]
    %v588 = vld [vmem:[#allocation2 + $0x2c] sm:$0xf]
    %v589 = vld [vmem:[#allocation2 + $0x30] sm:$0xf]
    %v590 = vld [vmem:[#allocation2 + $0x34] sm:$0xf]
    %v591 = vld [vmem:[#allocation2 + $0x38] sm:$0xf]
    %v592 = vld [vmem:[#allocation2 + $0x3c] sm:$0xf]
    %v593 = vld [vmem:[#allocation9] sm:$0xf]
    %v594 = vld [vmem:[#allocation9 + $0x4] sm:$0xf]
    %v595 = vld [vmem:[#allocation9 + $0x8] sm:$0xf]
    %v596 = vld [vmem:[#allocation9 + $0xc] sm:$0xf]
    %v597 = vld [vmem:[#allocation9 + $0x10] sm:$0xf]
    %v598 = vld [vmem:[#allocation9 + $0x14] sm:$0xf]
    %v599 = vld [vmem:[#allocation9 + $0x18] sm:$0xf]
    %v600 = vld [vmem:[#allocation9 + $0x1c] sm:$0xf]
    %v601 = vld [vmem:[#allocation9 + $0x20] sm:$0xf]
    %v602 = vld [vmem:[#allocation9 + $0x24] sm:$0xf]
    %v603 = vld [vmem:[#allocation9 + $0x28] sm:$0xf]
    %v604 = vld [vmem:[#allocation9 + $0x2c] sm:$0xf]
    %v605 = vld [vmem:[#allocation9 + $0x30] sm:$0xf]
    %v606 = vld [vmem:[#allocation9 + $0x34] sm:$0xf]
    %v607 = vld [vmem:[#allocation9 + $0x38] sm:$0xf]
    %v608 = vld [vmem:[#allocation9 + $0x3c] sm:$0xf]
    %v625 = vunpack.c.l.b16 %v577
    %v626 = vunpack.c.l.b16 %v578
    %v627 = vunpack.c.l.b16 %v579
    %v628 = vunpack.c.l.b16 %v580
    %v629 = vunpack.c.l.b16 %v581
    %v630 = vunpack.c.l.b16 %v582
    %v631 = vunpack.c.l.b16 %v583
    %v632 = vunpack.c.l.b16 %v584
    %v633 = vunpack.c.l.b16 %v585
    %v634 = vunpack.c.l.b16 %v586
    %v635 = vunpack.c.l.b16 %v587
    %v636 = vunpack.c.l.b16 %v588
    %v637 = vunpack.c.l.b16 %v589
    %v638 = vunpack.c.l.b16 %v590
    %v639 = vunpack.c.l.b16 %v591
    %v640 = vunpack.c.l.b16 %v592
    %v641 = vpack.c.b16 %v626, %v625
    %v642 = vpack.c.b16 %v628, %v627
    %v643 = vpack.c.b16 %v630, %v629
    %v644 = vpack.c.b16 %v632, %v631
    %v645 = vpack.c.b16 %v634, %v633
    %v646 = vpack.c.b16 %v636, %v635
    %v647 = vpack.c.b16 %v638, %v637
    %v648 = vpack.c.b16 %v640, %v639
    %v673 = vunpack.c.l.b16 %v593
    %v674 = vunpack.c.l.b16 %v594
    %v675 = vunpack.c.l.b16 %v595
    %v676 = vunpack.c.l.b16 %v596
    %v677 = vunpack.c.l.b16 %v597
    %v678 = vunpack.c.l.b16 %v598
    %v679 = vunpack.c.l.b16 %v599
    %v680 = vunpack.c.l.b16 %v600
    %v681 = vunpack.c.l.b16 %v601
    %v682 = vunpack.c.l.b16 %v602
    %v683 = vunpack.c.l.b16 %v603
    %v684 = vunpack.c.l.b16 %v604
    %v685 = vunpack.c.l.b16 %v605
    %v686 = vunpack.c.l.b16 %v606
    %v687 = vunpack.c.l.b16 %v607
    %v688 = vunpack.c.l.b16 %v608
    %v689 = vpack.c.b16 %v674, %v673
    %v690 = vpack.c.b16 %v676, %v675
    %v691 = vpack.c.b16 %v678, %v677
    %v692 = vpack.c.b16 %v680, %v679
    %v693 = vpack.c.b16 %v682, %v681
    %v694 = vpack.c.b16 %v684, %v683
    %v695 = vpack.c.b16 %v686, %v685
    %v696 = vpack.c.b16 %v688, %v687
    %705 = vmatprep.subr.bf16.mxu0 0
    %706 = vmatpush1.bf16.msra.mxu0 %v696
    %707 = vmatprep.subr.bf16.mxu0 0
    %708 = vmatpush1.bf16.msra.mxu0 %v695
    %709 = vmatprep.subr.bf16.mxu0 0
    %710 = vmatpush1.bf16.msra.mxu0 %v694
    %711 = vmatprep.subr.bf16.mxu0 0
    %712 = vmatpush1.bf16.msra.mxu0 %v693
    %713 = vmatprep.subr.bf16.mxu0 0
    %714 = vmatpush1.bf16.msra.mxu0 %v692
    %715 = vmatprep.subr.bf16.mxu0 0
    %716 = vmatpush1.bf16.msra.mxu0 %v691
    %717 = vmatprep.subr.bf16.mxu0 0
    %718 = vmatpush1.bf16.msra.mxu0 %v690
    %719 = vmatprep.subr.bf16.mxu0 0
    %720 = vmatpush1.bf16.msra.mxu0 %v689
    %721 = vmatprep.subr.bf16.mxu0 0
    %722 = vmatpush2.bf16.msra.mxu0 0
    %723 = vmatprep.subr.bf16.mxu0 0
    %724 = vmatpush2.bf16.msra.mxu0 0
    %725 = vmatprep.subr.bf16.mxu0 0
    %726 = vmatpush2.bf16.msra.mxu0 0
    %727 = vmatprep.subr.bf16.mxu0 0
    %728 = vmatpush2.bf16.msra.mxu0 0
    %729 = vmatprep.subr.bf16.mxu0 0
    %730 = vmatpush2.bf16.msra.mxu0 0
    %731 = vmatprep.subr.bf16.mxu0 0
    %732 = vmatpush2.bf16.msra.mxu0 0
    %733 = vmatprep.subr.bf16.mxu0 0
    %734 = vmatpush2.bf16.msra.mxu0 0
    %735 = vmatprep.subr.bf16.mxu0 0
    %736 = vmatpush2.bf16.msra.mxu0 0
    %737 = vmatprep.mubr.bf16.mxu0 0
    %738 = vmatmul.mubr.bf16.gmra.mxu0 %v641
    %v739 = vpop.f32.mrf.mxu0
    %v740 = vadd.f32 0.0, %v739
    %v741 = vpop.f32.mrf.mxu0
    %v742 = vpop.f32.mrf.mxu0
    %v743 = vadd.f32 0.0, %v742
    %v744 = vpop.f32.mrf.mxu0
    %745 = vmatprep.mubr.bf16.mxu0 0
    %746 = vmatmul.mubr.bf16.gmra.mxu0 %v642
    %v747 = vpop.f32.mrf.mxu0
    %v748 = vadd.f32 0.0, %v747
    %v749 = vpop.f32.mrf.mxu0
    %v750 = vpop.f32.mrf.mxu0
    %v751 = vadd.f32 0.0, %v750
    %v752 = vpop.f32.mrf.mxu0
    %753 = vmatprep.mubr.bf16.mxu0 0
    %754 = vmatmul.mubr.bf16.gmra.mxu0 %v643
    %v755 = vpop.f32.mrf.mxu0
    %v756 = vadd.f32 0.0, %v755
    %v757 = vpop.f32.mrf.mxu0
    %v758 = vpop.f32.mrf.mxu0
    %v759 = vadd.f32 0.0, %v758
    %v760 = vpop.f32.mrf.mxu0
    %761 = vmatprep.mubr.bf16.mxu0 0
    %762 = vmatmul.mubr.bf16.gmra.mxu0 %v644
    %v763 = vpop.f32.mrf.mxu0
    %v764 = vadd.f32 0.0, %v763
    %v765 = vpop.f32.mrf.mxu0
    %v766 = vpop.f32.mrf.mxu0
    %v767 = vadd.f32 0.0, %v766
    %v768 = vpop.f32.mrf.mxu0
    %769 = vmatprep.mubr.bf16.mxu0 0
    %770 = vmatmul.mubr.bf16.gmra.mxu0 %v645
    %v771 = vpop.f32.mrf.mxu0
    %v772 = vadd.f32 0.0, %v771
    %v773 = vpop.f32.mrf.mxu0
    %v774 = vpop.f32.mrf.mxu0
    %v775 = vadd.f32 0.0, %v774
    %v776 = vpop.f32.mrf.mxu0
    %777 = vmatprep.mubr.bf16.mxu0 0
    %778 = vmatmul.mubr.bf16.gmra.mxu0 %v646
    %v779 = vpop.f32.mrf.mxu0
    %v780 = vadd.f32 0.0, %v779
    %v781 = vpop.f32.mrf.mxu0
    %v782 = vpop.f32.mrf.mxu0
    %v783 = vadd.f32 0.0, %v782
    %v784 = vpop.f32.mrf.mxu0
    %785 = vmatprep.mubr.bf16.mxu0 0
    %786 = vmatmul.mubr.bf16.gmra.mxu0 %v647
    %v787 = vpop.f32.mrf.mxu0
    %v788 = vadd.f32 0.0, %v787
    %v789 = vpop.f32.mrf.mxu0
    %v790 = vpop.f32.mrf.mxu0
    %v791 = vadd.f32 0.0, %v790
    %v792 = vpop.f32.mrf.mxu0
    %793 = vmatprep.mubr.bf16.mxu0 0
    %794 = vmatmul.mubr.bf16.gmra.mxu0 %v648
    %v795 = vpop.f32.mrf.mxu0
    %v796 = vadd.f32 0.0, %v795
    %v797 = vpop.f32.mrf.mxu0
    %v798 = vpop.f32.mrf.mxu0
    %v799 = vadd.f32 0.0, %v798
    %v800 = vpop.f32.mrf.mxu0
    %801 = vdwg.mxu0
    %v802 = vld [vmem:[#allocation3] sm:$0xf]
    %v803 = vld [vmem:[#allocation3 + $0x4] sm:$0xf]
    %v804 = vld [vmem:[#allocation3 + $0x8] sm:$0xf]
    %v805 = vld [vmem:[#allocation3 + $0xc] sm:$0xf]
    %v806 = vld [vmem:[#allocation3 + $0x10] sm:$0xf]
    %v807 = vld [vmem:[#allocation3 + $0x14] sm:$0xf]
    %v808 = vld [vmem:[#allocation3 + $0x18] sm:$0xf]
    %v809 = vld [vmem:[#allocation3 + $0x1c] sm:$0xf]
    %v810 = vld [vmem:[#allocation3 + $0x20] sm:$0xf]
    %v811 = vld [vmem:[#allocation3 + $0x24] sm:$0xf]
    %v812 = vld [vmem:[#allocation3 + $0x28] sm:$0xf]
    %v813 = vld [vmem:[#allocation3 + $0x2c] sm:$0xf]
    %v814 = vld [vmem:[#allocation3 + $0x30] sm:$0xf]
    %v815 = vld [vmem:[#allocation3 + $0x34] sm:$0xf]
    %v816 = vld [vmem:[#allocation3 + $0x38] sm:$0xf]
    %v817 = vld [vmem:[#allocation3 + $0x3c] sm:$0xf]
    %v818 = vpack.c.bf16 %v743, %v740
    %v819 = vpack.c.bf16 %v751, %v748
    %v820 = vpack.c.bf16 %v759, %v756
    %v821 = vpack.c.bf16 %v767, %v764
    %v822 = vpack.c.bf16 %v775, %v772
    %v823 = vpack.c.bf16 %v783, %v780
    %v824 = vpack.c.bf16 %v791, %v788
    %v825 = vpack.c.bf16 %v799, %v796
    %v826 = vld [vmem:[%s5] sm:$0x1]
    %v828 = vlaneseq
    %v829 = vshrl.u32 %v828, 7
    %v830 = vsub.s32 0, %v829
    %v831 = vrot.slane %v826, %v830
    %v849 = vunpack.c.l.b16 %v802
    %v850 = vunpack.c.l.b16 %v803
    %v851 = vunpack.c.l.b16 %v804
    %v852 = vunpack.c.l.b16 %v805
    %v853 = vunpack.c.l.b16 %v806
    %v854 = vunpack.c.l.b16 %v807
    %v855 = vunpack.c.l.b16 %v808
    %v856 = vunpack.c.l.b16 %v809
    %v857 = vunpack.c.l.b16 %v810
    %v858 = vunpack.c.l.b16 %v811
    %v859 = vunpack.c.l.b16 %v812
    %v860 = vunpack.c.l.b16 %v813
    %v861 = vunpack.c.l.b16 %v814
    %v862 = vunpack.c.l.b16 %v815
    %v863 = vunpack.c.l.b16 %v816
    %v864 = vunpack.c.l.b16 %v817
    %v865 = vpack.c.b16 %v850, %v849
    %v866 = vpack.c.b16 %v852, %v851
    %v867 = vpack.c.b16 %v854, %v853
    %v868 = vpack.c.b16 %v856, %v855
    %v869 = vpack.c.b16 %v858, %v857
    %v870 = vpack.c.b16 %v860, %v859
    %v871 = vpack.c.b16 %v862, %v861
    %v872 = vpack.c.b16 %v864, %v863
    %881 = vmatprep.subr.bf16.mxu0 0
    %882 = vmatpush1.bf16.msra.mxu0 %v825
    %883 = vmatprep.subr.bf16.mxu0 0
    %884 = vmatpush1.bf16.msra.mxu0 %v824
    %885 = vmatprep.subr.bf16.mxu0 0
    %886 = vmatpush1.bf16.msra.mxu0 %v823
    %887 = vmatprep.subr.bf16.mxu0 0
    %888 = vmatpush1.bf16.msra.mxu0 %v822
    %889 = vmatprep.subr.bf16.mxu0 0
    %890 = vmatpush1.bf16.msra.mxu0 %v821
    %891 = vmatprep.subr.bf16.mxu0 0
    %892 = vmatpush1.bf16.msra.mxu0 %v820
    %893 = vmatprep.subr.bf16.mxu0 0
    %894 = vmatpush1.bf16.msra.mxu0 %v819
    %895 = vmatprep.subr.bf16.mxu0 0
    %896 = vmatpush1.bf16.msra.mxu0 %v818
    %897 = vmatprep.subr.bf16.mxu0 0
    %898 = vmatpush2.bf16.msra.mxu0 0
    %899 = vmatprep.subr.bf16.mxu0 0
    %900 = vmatpush2.bf16.msra.mxu0 0
    %901 = vmatprep.subr.bf16.mxu0 0
    %902 = vmatpush2.bf16.msra.mxu0 0
    %903 = vmatprep.subr.bf16.mxu0 0
    %904 = vmatpush2.bf16.msra.mxu0 0
    %905 = vmatprep.subr.bf16.mxu0 0
    %906 = vmatpush2.bf16.msra.mxu0 0
    %907 = vmatprep.subr.bf16.mxu0 0
    %908 = vmatpush2.bf16.msra.mxu0 0
    %909 = vmatprep.subr.bf16.mxu0 0
    %910 = vmatpush2.bf16.msra.mxu0 0
    %911 = vmatprep.subr.bf16.mxu0 0
    %912 = vmatpush2.bf16.msra.mxu0 0
    %913 = vmatprep.mubr.bf16.mxu0 0
    %914 = vmatmul.mubr.bf16.gmra.mxu0 %v865
    %v915 = vpop.f32.mrf.mxu0
    %v916 = vadd.f32 %v831, %v915
    %v917 = vpop.f32.mrf.mxu0
    %v918 = vpop.f32.mrf.mxu0
    %v919 = vadd.f32 %v831, %v918
    %v920 = vpop.f32.mrf.mxu0
    %921 = vmatprep.mubr.bf16.mxu0 0
    %922 = vmatmul.mubr.bf16.gmra.mxu0 %v866
    %v923 = vpop.f32.mrf.mxu0
    %v924 = vadd.f32 %v831, %v923
    %v925 = vpop.f32.mrf.mxu0
    %v926 = vpop.f32.mrf.mxu0
    %v927 = vadd.f32 %v831, %v926
    %v928 = vpop.f32.mrf.mxu0
    %929 = vmatprep.mubr.bf16.mxu0 0
    %930 = vmatmul.mubr.bf16.gmra.mxu0 %v867
    %v931 = vpop.f32.mrf.mxu0
    %v932 = vadd.f32 %v831, %v931
    %v933 = vpop.f32.mrf.mxu0
    %v934 = vpop.f32.mrf.mxu0
    %v935 = vadd.f32 %v831, %v934
    %v936 = vpop.f32.mrf.mxu0
    %937 = vmatprep.mubr.bf16.mxu0 0
    %938 = vmatmul.mubr.bf16.gmra.mxu0 %v868
    %v939 = vpop.f32.mrf.mxu0
    %v940 = vadd.f32 %v831, %v939
    %v941 = vpop.f32.mrf.mxu0
    %v942 = vpop.f32.mrf.mxu0
    %v943 = vadd.f32 %v831, %v942
    %v944 = vpop.f32.mrf.mxu0
    %945 = vmatprep.mubr.bf16.mxu0 0
    %946 = vmatmul.mubr.bf16.gmra.mxu0 %v869
    %v947 = vpop.f32.mrf.mxu0
    %v948 = vadd.f32 %v831, %v947
    %v949 = vpop.f32.mrf.mxu0
    %v950 = vpop.f32.mrf.mxu0
    %v951 = vadd.f32 %v831, %v950
    %v952 = vpop.f32.mrf.mxu0
    %953 = vmatprep.mubr.bf16.mxu0 0
    %954 = vmatmul.mubr.bf16.gmra.mxu0 %v870
    %v955 = vpop.f32.mrf.mxu0
    %v956 = vadd.f32 %v831, %v955
    %v957 = vpop.f32.mrf.mxu0
    %v958 = vpop.f32.mrf.mxu0
    %v959 = vadd.f32 %v831, %v958
    %v960 = vpop.f32.mrf.mxu0
    %961 = vmatprep.mubr.bf16.mxu0 0
    %962 = vmatmul.mubr.bf16.gmra.mxu0 %v871
    %v963 = vpop.f32.mrf.mxu0
    %v964 = vadd.f32 %v831, %v963
    %v965 = vpop.f32.mrf.mxu0
    %v966 = vpop.f32.mrf.mxu0
    %v967 = vadd.f32 %v831, %v966
    %v968 = vpop.f32.mrf.mxu0
    %969 = vmatprep.mubr.bf16.mxu0 0
    %970 = vmatmul.mubr.bf16.gmra.mxu0 %v872
    %v971 = vpop.f32.mrf.mxu0
    %v972 = vadd.f32 %v831, %v971
    %v973 = vpop.f32.mrf.mxu0
    %v974 = vpop.f32.mrf.mxu0
    %v975 = vadd.f32 %v831, %v974
    %v976 = vpop.f32.mrf.mxu0
    %977 = vdwg.mxu0
    %v978 = vlaneseq
    %v979 = vand.u32 %v978, 127
    %vm980 = vcmp.lt.s32.totalorder %v979, 4
    %v981 = vsel %vm980, %v916, -inf
    %v982 = vsel %vm980, %v919, -inf
    %v983 = vsel %vm980, %v924, -inf
    %v984 = vsel %vm980, %v927, -inf
    %v985 = vsel %vm980, %v932, -inf
    %v986 = vsel %vm980, %v935, -inf
    %v987 = vsel %vm980, %v940, -inf
    %v988 = vsel %vm980, %v943, -inf
    %v989 = vsel %vm980, %v948, -inf
    %v990 = vsel %vm980, %v951, -inf
    %v991 = vsel %vm980, %v956, -inf
    %v992 = vsel %vm980, %v959, -inf
    %v993 = vsel %vm980, %v964, -inf
    %v994 = vsel %vm980, %v967, -inf
    %v995 = vsel %vm980, %v972, -inf
    %v996 = vsel %vm980, %v975, -inf
    %997 = vmax.xlane.f32.xlu0 %v981
    %v998 = vpop.xlane.xlu0 %997
    %999 = vmax.xlane.f32.xlu0 %v982
    %v1000 = vpop.xlane.xlu0 %999
    %1001 = vmax.xlane.f32.xlu0 %v983
    %v1002 = vpop.xlane.xlu0 %1001
    %1003 = vmax.xlane.f32.xlu0 %v984
    %v1004 = vpop.xlane.xlu0 %1003
    %1005 = vmax.xlane.f32.xlu0 %v985
    %v1006 = vpop.xlane.xlu0 %1005
    %1007 = vmax.xlane.f32.xlu0 %v986
    %v1008 = vpop.xlane.xlu0 %1007
    %1009 = vmax.xlane.f32.xlu0 %v987
    %v1010 = vpop.xlane.xlu0 %1009
    %1011 = vmax.xlane.f32.xlu0 %v988
    %v1012 = vpop.xlane.xlu0 %1011
    %1013 = vmax.xlane.f32.xlu0 %v989
    %v1014 = vpop.xlane.xlu0 %1013
    %1015 = vmax.xlane.f32.xlu0 %v990
    %v1016 = vpop.xlane.xlu0 %1015
    %1017 = vmax.xlane.f32.xlu0 %v991
    %v1018 = vpop.xlane.xlu0 %1017
    %1019 = vmax.xlane.f32.xlu0 %v992
    %v1020 = vpop.xlane.xlu0 %1019
    %1021 = vmax.xlane.f32.xlu0 %v993
    %v1022 = vpop.xlane.xlu0 %1021
    %1023 = vmax.xlane.f32.xlu0 %v994
    %v1024 = vpop.xlane.xlu0 %1023
    %1025 = vmax.xlane.f32.xlu0 %v995
    %v1026 = vpop.xlane.xlu0 %1025
    %1027 = vmax.xlane.f32.xlu0 %v996
    %v1028 = vpop.xlane.xlu0 %1027
    %v1029 = vsub.f32 %v981, %v998
    %v1030 = vsub.f32 %v982, %v1000
    %v1031 = vsub.f32 %v983, %v1002
    %v1032 = vsub.f32 %v984, %v1004
    %v1033 = vsub.f32 %v985, %v1006
    %v1034 = vsub.f32 %v986, %v1008
    %v1035 = vsub.f32 %v987, %v1010
    %v1036 = vsub.f32 %v988, %v1012
    %v1037 = vsub.f32 %v989, %v1014
    %v1038 = vsub.f32 %v990, %v1016
    %v1039 = vsub.f32 %v991, %v1018
    %v1040 = vsub.f32 %v992, %v1020
    %v1041 = vsub.f32 %v993, %v1022
    %v1042 = vsub.f32 %v994, %v1024
    %v1043 = vsub.f32 %v995, %v1026
    %v1044 = vsub.f32 %v996, %v1028
    %v1045 = vmul.f32 %v1029, 1.442695
    %v1046 = vpow.pop %v1045
    %v1047 = vmul.f32 %v1030, 1.442695
    %v1048 = vpow.pop %v1047
    %v1049 = vmul.f32 %v1031, 1.442695
    %v1050 = vpow.pop %v1049
    %v1051 = vmul.f32 %v1032, 1.442695
    %v1052 = vpow.pop %v1051
    %v1053 = vmul.f32 %v1033, 1.442695
    %v1054 = vpow.pop %v1053
    %v1055 = vmul.f32 %v1034, 1.442695
    %v1056 = vpow.pop %v1055
    %v1057 = vmul.f32 %v1035, 1.442695
    %v1058 = vpow.pop %v1057
    %v1059 = vmul.f32 %v1036, 1.442695
    %v1060 = vpow.pop %v1059
    %v1061 = vmul.f32 %v1037, 1.442695
    %v1062 = vpow.pop %v1061
    %v1063 = vmul.f32 %v1038, 1.442695
    %v1064 = vpow.pop %v1063
    %v1065 = vmul.f32 %v1039, 1.442695
    %v1066 = vpow.pop %v1065
    %v1067 = vmul.f32 %v1040, 1.442695
    %v1068 = vpow.pop %v1067
    %v1069 = vmul.f32 %v1041, 1.442695
    %v1070 = vpow.pop %v1069
    %v1071 = vmul.f32 %v1042, 1.442695
    %v1072 = vpow.pop %v1071
    %v1073 = vmul.f32 %v1043, 1.442695
    %v1074 = vpow.pop %v1073
    %v1075 = vmul.f32 %v1044, 1.442695
    %v1076 = vpow.pop %v1075
    %1077 = vadd.xlane.f32.xlu0 %v1046
    %v1078 = vpop.xlane.xlu0 %1077
    %1079 = vadd.xlane.f32.xlu0 %v1048
    %v1080 = vpop.xlane.xlu0 %1079
    %1081 = vadd.xlane.f32.xlu0 %v1050
    %v1082 = vpop.xlane.xlu0 %1081
    %1083 = vadd.xlane.f32.xlu0 %v1052
    %v1084 = vpop.xlane.xlu0 %1083
    %1085 = vadd.xlane.f32.xlu0 %v1054
    %v1086 = vpop.xlane.xlu0 %1085
    %1087 = vadd.xlane.f32.xlu0 %v1056
    %v1088 = vpop.xlane.xlu0 %1087
    %1089 = vadd.xlane.f32.xlu0 %v1058
    %v1090 = vpop.xlane.xlu0 %1089
    %1091 = vadd.xlane.f32.xlu0 %v1060
    %v1092 = vpop.xlane.xlu0 %1091
    %1093 = vadd.xlane.f32.xlu0 %v1062
    %v1094 = vpop.xlane.xlu0 %1093
    %1095 = vadd.xlane.f32.xlu0 %v1064
    %v1096 = vpop.xlane.xlu0 %1095
    %1097 = vadd.xlane.f32.xlu0 %v1066
    %v1098 = vpop.xlane.xlu0 %1097
    %1099 = vadd.xlane.f32.xlu0 %v1068
    %v1100 = vpop.xlane.xlu0 %1099
    %1101 = vadd.xlane.f32.xlu0 %v1070
    %v1102 = vpop.xlane.xlu0 %1101
    %1103 = vadd.xlane.f32.xlu0 %v1072
    %v1104 = vpop.xlane.xlu0 %1103
    %1105 = vadd.xlane.f32.xlu0 %v1074
    %v1106 = vpop.xlane.xlu0 %1105
    %1107 = vadd.xlane.f32.xlu0 %v1076
    %v1108 = vpop.xlane.xlu0 %1107
    %v1109 = vlog2.pop %v1078
    %v1110 = vmul.f32 %v1109, 0.6931472
    %v1111 = vlog2.pop %v1080
    %v1112 = vmul.f32 %v1111, 0.6931472
    %v1113 = vlog2.pop %v1082
    %v1114 = vmul.f32 %v1113, 0.6931472
    %v1115 = vlog2.pop %v1084
    %v1116 = vmul.f32 %v1115, 0.6931472
    %v1117 = vlog2.pop %v1086
    %v1118 = vmul.f32 %v1117, 0.6931472
    %v1119 = vlog2.pop %v1088
    %v1120 = vmul.f32 %v1119, 0.6931472
    %v1121 = vlog2.pop %v1090
    %v1122 = vmul.f32 %v1121, 0.6931472
    %v1123 = vlog2.pop %v1092
    %v1124 = vmul.f32 %v1123, 0.6931472
    %v1125 = vlog2.pop %v1094
    %v1126 = vmul.f32 %v1125, 0.6931472
    %v1127 = vlog2.pop %v1096
    %v1128 = vmul.f32 %v1127, 0.6931472
    %v1129 = vlog2.pop %v1098
    %v1130 = vmul.f32 %v1129, 0.6931472
    %v1131 = vlog2.pop %v1100
    %v1132 = vmul.f32 %v1131, 0.6931472
    %v1133 = vlog2.pop %v1102
    %v1134 = vmul.f32 %v1133, 0.6931472
    %v1135 = vlog2.pop %v1104
    %v1136 = vmul.f32 %v1135, 0.6931472
    %v1137 = vlog2.pop %v1106
    %v1138 = vmul.f32 %v1137, 0.6931472
    %v1139 = vlog2.pop %v1108
    %v1140 = vmul.f32 %v1139, 0.6931472
    %v1141 = vadd.f32 %v998, %v1110
    %v1142 = vadd.f32 %v1000, %v1112
    %v1143 = vadd.f32 %v1002, %v1114
    %v1144 = vadd.f32 %v1004, %v1116
    %v1145 = vadd.f32 %v1006, %v1118
    %v1146 = vadd.f32 %v1008, %v1120
    %v1147 = vadd.f32 %v1010, %v1122
    %v1148 = vadd.f32 %v1012, %v1124
    %v1149 = vadd.f32 %v1014, %v1126
    %v1150 = vadd.f32 %v1016, %v1128
    %v1151 = vadd.f32 %v1018, %v1130
    %v1152 = vadd.f32 %v1020, %v1132
    %v1153 = vadd.f32 %v1022, %v1134
    %v1154 = vadd.f32 %v1024, %v1136
    %v1155 = vadd.f32 %v1026, %v1138
    %v1156 = vadd.f32 %v1028, %v1140
    %v1157 = vsub.f32 %v981, %v1141
    %v1158 = vsub.f32 %v982, %v1142
    %v1159 = vsub.f32 %v983, %v1143
    %v1160 = vsub.f32 %v984, %v1144
    %v1161 = vsub.f32 %v985, %v1145
    %v1162 = vsub.f32 %v986, %v1146
    %v1163 = vsub.f32 %v987, %v1147
    %v1164 = vsub.f32 %v988, %v1148
    %v1165 = vsub.f32 %v989, %v1149
    %v1166 = vsub.f32 %v990, %v1150
    %v1167 = vsub.f32 %v991, %v1151
    %v1168 = vsub.f32 %v992, %v1152
    %v1169 = vsub.f32 %v993, %v1153
    %v1170 = vsub.f32 %v994, %v1154
    %v1171 = vsub.f32 %v995, %v1155
    %v1172 = vsub.f32 %v996, %v1156
    %1173 = vst [vmem:[#allocation11] sm:$0xff] %v1157
    %1174 = vst [vmem:[#allocation11 + $0x8] sm:$0xff] %v1158
    %1175 = vst [vmem:[#allocation11 + $0x10] sm:$0xff] %v1159
    %1176 = vst [vmem:[#allocation11 + $0x18] sm:$0xff] %v1160
    %1177 = vst [vmem:[#allocation11 + $0x20] sm:$0xff] %v1161
    %1178 = vst [vmem:[#allocation11 + $0x28] sm:$0xff] %v1162
    %1179 = vst [vmem:[#allocation11 + $0x30] sm:$0xff] %v1163
    %1180 = vst [vmem:[#allocation11 + $0x38] sm:$0xff] %v1164
    %1181 = vst [vmem:[#allocation11 + $0x40] sm:$0xff] %v1165
    %1182 = vst [vmem:[#allocation11 + $0x48] sm:$0xff] %v1166
    %1183 = vst [vmem:[#allocation11 + $0x50] sm:$0xff] %v1167
    %1184 = vst [vmem:[#allocation11 + $0x58] sm:$0xff] %v1168
    %1185 = vst [vmem:[#allocation11 + $0x60] sm:$0xff] %v1169
    %1186 = vst [vmem:[#allocation11 + $0x68] sm:$0xff] %v1170
    %1187 = vst [vmem:[#allocation11 + $0x70] sm:$0xff] %v1171
    %1188 = vst [vmem:[#allocation11 + $0x78] sm:$0xff] %v1172
    // Predicated region
    $region42: #{tpu_custom_call.1} parent=1 // pred_check
      _
    $region43: #{tpu_custom_call.1} parent=1 // pred_check_branch
      %1190 = sbr.rel (0) target = $region45
    $region44: #{tpu_custom_call.1} parent=1 // pred_region
      %s1192 = ssub.s32 2048, 2048
      %1193 = vsyncadd [#allocation5], %s1192
      %s1194 = sshll.u32 [#allocation11], 4
      %s1195 = int_to_ptr.vmem [resolvable:$true] %s1194
      %1200 = dma.vmem_to_hbm [thread:$0]  %s1195, 2048, %s6, [#allocation5], 128, 128, 8
    $region45: #{tpu_custom_call.1} parent=1 // pred_fallthru
      _
    // Predicated region
    $region46: #{tpu_custom_call.1} parent=1 // pred_check
      _
    $region47: #{tpu_custom_call.1} parent=1 // pred_check_branch
      %1202 = sbr.rel (0) target = $region49
    $region48: #{tpu_custom_call.1} parent=1 // pred_region
      %1203 = dma.done [#allocation5], 2048
    $region49: #{tpu_custom_call.1} parent=1 // pred_fallthru
      _
    %1204 = vsyncpa [#allocation4], 1
    %1205 = vsyncpa [#allocation7], 1
    %1206 = vsyncpa [#allocation10], 1
    %1207 = vsyncpa [#allocation5], 1

</llo_original>
